<compile_context>
chip_gen: v7x
topology: tpu7x:2x2x1
jax: 0.10.0
libtpu: 0.0.40
codegen_flags: <defaults>
</compile_context>

<pallas_src>
import functools

import jax
import jax.numpy as jnp
from jax.experimental import pallas as pl
from jax.experimental.pallas import tpu as pltpu


_LANE = 128
_SUBLANE = 8


def _round_up(x, m):
    return ((x + m - 1) // m) * m


def _utterance_net_out_kernel(x_ref, wt_ref, b_ref, y_ref):
    """One batch tile of the folded affine map, transposed output layout.

    x_ref : (tb, D)   input tile (rows = batch)
    wt_ref: (Cp, D)   folded, transposed weight  (W2 @ W1 @ diag(scale))^T padded to Cp sublanes
    b_ref : (Cp, 1)   folded bias (padded)
    y_ref : (Cp, tb)  output tile, lane-dense along batch
    """
    y = jax.lax.dot_general(
        wt_ref[...], x_ref[...],
        dimension_numbers=(((1,), (1,)), ((), ())),   # contract on D
        preferred_element_type=jnp.float32)
    y_ref[...] = (y + b_ref[...]).astype(y_ref.dtype)


def fold_params(params):
    """Collapse BN(eval) + Linear(D,2H) + Linear(2H,C) into one affine map.

    Run ONCE per parameter set (hoisted out of the per-call path).
    Returns (wt_pad [Cp, D], b_pad [Cp, 1], C) with Cp = round_up(C, 8).
    Note: the fold reassociates f32 math; at larger hidden dims tolerances may
    need loosening (or compute the fold in higher precision upstream).
    """
    gamma, beta = params["gamma"], params["beta"]
    mean, var, eps = params["running_mean"], params["running_var"], params["eps"]
    w1, b1, w2, b2 = params["w1"], params["b1"], params["w2"], params["b2"]

    C = int(w2.shape[0])
    D = int(w1.shape[1])

    scale = gamma * jax.lax.rsqrt(var + eps)                   # [D]
    shift = beta - mean * scale                                # [D]
    w1_t = jnp.transpose(w1).astype(jnp.float32)               # [D, 2H]
    w2_t = jnp.transpose(w2).astype(jnp.float32)               # [2H, C]

    w_fold = (scale[:, None] * w1_t) @ w2_t                    # [D, C]
    b_fold = (shift @ w1_t + b1.astype(jnp.float32)) @ w2_t + b2.astype(jnp.float32)  # [C]

    Cp = _round_up(C, _SUBLANE)
    wt_pad = jnp.zeros((Cp, D), jnp.float32).at[:C, :].set(w_fold.T)
    b_pad = jnp.zeros((Cp, 1), jnp.float32).at[:C, 0].set(b_fold)
    return wt_pad, b_pad, C


@functools.partial(jax.jit, static_argnames=("out_class", "tile_b"))
def utterance_net_out(x, wt_pad, b_pad, out_class, tile_b=1024):
    """x: [B, D] float32. wt_pad/b_pad from fold_params. Returns [B, out_class]."""
    B, D = x.shape
    Cp = wt_pad.shape[0]

    # ---- Batch tile selection (lane-dense along batch in the output). ----
    tile_b = max(_LANE, _round_up(int(tile_b), _LANE))
    if B > tile_b:
        tb = tile_b
    elif B >= 2 * _LANE:
        # Keep >= 2 parallel grid steps so both v7x TensorCores get work.
        tb = _round_up(pl.cdiv(B, 2), _LANE)
    else:
        tb = B  # single full-extent block (allowed regardless of divisibility)

    grid = (pl.cdiv(B, tb),)

    out = pl.pallas_call(
        _utterance_net_out_kernel,
        out_shape=jax.ShapeDtypeStruct((Cp, B), jnp.float32),
        grid_spec=pl.GridSpec(
            grid=grid,
            in_specs=[
                pl.BlockSpec((tb, D), lambda i: (i, 0)),   # x    : tiled over batch
                pl.BlockSpec((Cp, D), lambda i: (0, 0)),   # wt   : grid-invariant
                pl.BlockSpec((Cp, 1), lambda i: (0, 0)),   # bias : grid-invariant
            ],
            out_specs=pl.BlockSpec((Cp, tb), lambda i: (0, i)),
        ),
        compiler_params=pltpu.CompilerParams(
            dimension_semantics=("parallel",)),
    )(x.astype(jnp.float32), wt_pad, b_pad)

    # Tiny unpad: (Cp, B) -> (out_class, B) -> (B, out_class).
    return jnp.transpose(out[:out_class, :])


def init_params(key, input_size, hidden_dim, out_class):
    """Deterministic synthetic parameter init (shapes match the PyTorch module)."""
    ks = jax.random.split(key, 8)
    D, H2, C = input_size, 2 * hidden_dim, out_class
    params = {
        # BatchNorm1d(input_size)
        "gamma": jax.random.uniform(ks[0], (D,), jnp.float32, 0.5, 1.5),
        "beta": jax.random.normal(ks[1], (D,), jnp.float32) * 0.1,
        "running_mean": jax.random.normal(ks[2], (D,), jnp.float32) * 0.1,
        "running_var": jax.random.uniform(ks[3], (D,), jnp.float32, 0.5, 1.5),
        "eps": jnp.float32(1e-5),
        # input2hidden: Linear(D, 2H)  -> weight [2H, D], bias [2H]
        "w1": jax.random.normal(ks[4], (H2, D), jnp.float32) / jnp.sqrt(D),
        "b1": jax.random.normal(ks[5], (H2,), jnp.float32) * 0.01,
        # hidden2label: Linear(2H, C)  -> weight [C, 2H], bias [C]
        "w2": jax.random.normal(ks[6], (C, H2), jnp.float32) / jnp.sqrt(H2),
        "b2": jax.random.normal(ks[7], (C,), jnp.float32) * 0.01,
    }
    return params


def reference(x, p):
    """Pure-JAX reference of the eval-mode forward pass (unfolded)."""
    normed = (x - p["running_mean"]) * jax.lax.rsqrt(p["running_var"] + p["eps"]) \
             * p["gamma"] + p["beta"]
    # dropout is identity in eval mode
    h = normed @ p["w1"].T + p["b1"]
    y = h @ p["w2"].T + p["b2"]
    return y


if __name__ == "__main__":
    # Shapes consistent with the module: input_size=32, hidden_layer=32, out_class=4
    B, D, H, C = 16, 32, 32, 4

    key = jax.random.PRNGKey(0)
    k_x, k_p = jax.random.split(key)
    x = jax.random.normal(k_x, (B, D), jnp.float32)
    params = init_params(k_p, input_size=D, hidden_dim=H, out_class=C)

    # Fold once (hoisted out of the per-call path).
    wt_pad, b_pad, C_out = fold_params(params)
    wt_pad, b_pad = jax.block_until_ready((wt_pad, b_pad))

    y = utterance_net_out(x, wt_pad, b_pad, out_class=C_out)
    y = jax.block_until_ready(y)

    y_ref = reference(x, params)
    assert y.shape == (B, C)
    # Folding reassociates the f32 math; allow slightly looser tolerance.
    assert jnp.allclose(y, y_ref, atol=1e-3, rtol=1e-3), \
        f"max abs err {jnp.max(jnp.abs(y - y_ref))}"

    # Exercise the multi-step cdiv grid with a ragged last block (no jnp.pad path).
    x2 = jax.random.normal(jax.random.PRNGKey(1), (300, D), jnp.float32)
    y2 = jax.block_until_ready(utterance_net_out(x2, wt_pad, b_pad, out_class=C_out))
    assert y2.shape == (300, C)
    assert jnp.allclose(y2, reference(x2, params), atol=1e-3, rtol=1e-3), \
        f"max abs err {jnp.max(jnp.abs(y2 - reference(x2, params)))}"

    # And a tiny odd batch (single full-extent block path).
    x3 = jax.random.normal(jax.random.PRNGKey(2), (13, D), jnp.float32)
    y3 = jax.block_until_ready(utterance_net_out(x3, wt_pad, b_pad, out_class=C_out))
    assert jnp.allclose(y3, reference(x3, params), atol=1e-3, rtol=1e-3)

    print("KERNEL_OK")
</pallas_src>

<mosaic_0001>
module attributes {stable_mosaic.version = 11 : i64} {
  func.func @_utterance_net_out_kernel(%arg0: i32, %arg1: memref<16x32xf32, #tpu.memory_space<vmem>>, %arg2: memref<8x32xf32, #tpu.memory_space<vmem>>, %arg3: memref<8x1xf32, #tpu.memory_space<vmem>>, %arg4: memref<8x16xf32, #tpu.memory_space<vmem>>) attributes {dimension_semantics = [#tpu.dimension_semantics<parallel>], iteration_bounds = array<i64: 1>, scalar_prefetch = 0 : i64, scratch_operands = 0 : i64, tpu.core_type = #tpu.core_type<tc>, window_params = [{transform_indices = @transform_0, window_bounds = array<i64: 16, 32>}, {pipeline_mode = #tpu.pipeline_mode<synchronous>, transform_indices = @transform_1, window_bounds = array<i64: 8, 32>}, {pipeline_mode = #tpu.pipeline_mode<synchronous>, transform_indices = @transform_2, window_bounds = array<i64: 8, 1>}, {transform_indices = @transform_3, window_bounds = array<i64: 8, 16>}]} {
    %c0 = arith.constant 0 : index
    %c0_0 = arith.constant 0 : index
    %0 = vector.load %arg2[%c0, %c0_0] : memref<8x32xf32, #tpu.memory_space<vmem>>, vector<8x32xf32>
    %c0_1 = arith.constant 0 : index
    %c0_2 = arith.constant 0 : index
    %1 = vector.load %arg1[%c0_1, %c0_2] : memref<16x32xf32, #tpu.memory_space<vmem>>, vector<16x32xf32>
    %cst = arith.constant dense<0.000000e+00> : vector<8x16xf32>
    %2 = tpu.matmul %0, %1, %cst {dimension_numbers = #tpu.dot_dimension_numbers<[1], [1], [0], [0], [0, 0, 1, 0], [], []>} : vector<8x32xf32>, vector<16x32xf32>, vector<8x16xf32> -> vector<8x16xf32>
    %c0_3 = arith.constant 0 : index
    %c0_4 = arith.constant 0 : index
    %3 = vector.load %arg3[%c0_3, %c0_4] : memref<8x1xf32, #tpu.memory_space<vmem>>, vector<8x1xf32>
    %4 = vector.broadcast %3 : vector<8x1xf32> to vector<8x16xf32>
    %5 = arith.addf %2, %4 : vector<8x16xf32>
    %c0_5 = arith.constant 0 : index
    %c0_6 = arith.constant 0 : index
    %6 = vector.load %arg4[%c0_5, %c0_6] : memref<8x16xf32, #tpu.memory_space<vmem>>, vector<8x16xf32>
    tpu.vector_store %arg4[%c0_5, %c0_6], %5 {strides = array<i32>} : memref<8x16xf32, #tpu.memory_space<vmem>>, vector<8x16xf32>,
    return
  }
  func.func @transform_0(%arg0: i32) -> (i32, i32) {
    %c0_i32 = arith.constant 0 : i32
    %c0_i32_0 = arith.constant 0 : i32
    return %arg0, %c0_i32 : i32, i32
  }
  func.func @transform_1(%arg0: i32) -> (i32, i32) {
    %c0_i32 = arith.constant 0 : i32
    %c0_i32_0 = arith.constant 0 : i32
    %c0_i32_1 = arith.constant 0 : i32
    return %c0_i32, %c0_i32_0 : i32, i32
  }
  func.func @transform_2(%arg0: i32) -> (i32, i32) {
    %c0_i32 = arith.constant 0 : i32
    %c0_i32_0 = arith.constant 0 : i32
    %c0_i32_1 = arith.constant 0 : i32
    return %c0_i32, %c0_i32_0 : i32, i32
  }
  func.func @transform_3(%arg0: i32) -> (i32, i32) {
    %c0_i32 = arith.constant 0 : i32
    %c0_i32_0 = arith.constant 0 : i32
    return %c0_i32, %arg0 : i32, i32
  }
}

</mosaic_0001>

<llo_original>
// kernel: utterance_net_out.1
$region0: #{utterance_net_out.1}
  #allocation0 [shape = 'u32[]', space=smem, size = 0x4, offset = 0x4, fixed_abs, tag = 'smem constant byte address 0x4 - core index']
  #allocation1 [shape = 'u32[144,128]{1,0:T(1,128)}', space=vmem, size = 0x12000, scoped, tag = 'internal scratch']
  %s0 = inlined_call_operand.hbm [shape: f32[16,32], index: 0, kind: input, shape index: {}]
  %s1 = inlined_call_operand.vmem [shape: f32[8,32], index: 1, kind: input, shape index: {}]
  %s2 = inlined_call_operand.vmem [shape: f32[8,1], index: 2, kind: input, shape index: {}]
  %s3 = inlined_call_operand.vmem [shape: f32[8,16], index: 3, kind: output, shape index: {}]
  %s4 = sld [smem:[#allocation0]]
  $region26: #{utterance_net_out.1} parent=0
    _
  %s6 = ssub.s32 1, %s4
  %s7 = scalar_select 0, %s6, %s4
  $region1: #{utterance_net_out.1} parent=0
    #allocation2 [shape = 'u8[8192]{0}', space=vmem, size = 0x2000, scoped, tag = 'input window, operand 0, single buffered']
    #allocation3 [shape = 's32[1]{0}', space=sflag, size = 0x4, scoped, tag = 'scoped memory for utterance_net_out.1']
    %8 = vsyncpa [#allocation3], 0
    // Predicated region
    $region2: #{utterance_net_out.1} parent=1 // pred_check
      _
    $region3: #{utterance_net_out.1} parent=1 // pred_check_branch
      %10 = sbr.rel (0) target = $region5
    $region4: #{utterance_net_out.1} parent=1 // pred_region
      %s12 = ssub.s32 256, 256
      %13 = vsyncadd [#allocation3], %s12
      %s14 = sshll.u32 [#allocation2], 4
      %s15 = int_to_ptr.vmem [resolvable:$true] %s14
      %20 = dma.hbm_to_vmem [thread:$0]  %s0, 256, %s15, [#allocation3], 128, 128, 8
    $region5: #{utterance_net_out.1} parent=1 // pred_fallthru
      _
    // Predicated region
    $region6: #{utterance_net_out.1} parent=1 // pred_check
      _
    $region7: #{utterance_net_out.1} parent=1 // pred_check_branch
      %22 = sbr.rel (0) target = $region9
    $region8: #{utterance_net_out.1} parent=1 // pred_region
      _
    $region9: #{utterance_net_out.1} parent=1 // pred_fallthru
      _
    // Predicated region
    $region10: #{utterance_net_out.1} parent=1 // pred_check
      _
    $region11: #{utterance_net_out.1} parent=1 // pred_check_branch
      %24 = sbr.rel (0) target = $region13
    $region12: #{utterance_net_out.1} parent=1 // pred_region
      _
    $region13: #{utterance_net_out.1} parent=1 // pred_fallthru
      _
    // Predicated region
    $region14: #{utterance_net_out.1} parent=1 // pred_check
      _
    $region15: #{utterance_net_out.1} parent=1 // pred_check_branch
      %26 = sbr.rel (0) target = $region17
    $region16: #{utterance_net_out.1} parent=1 // pred_region
      %27 = dma.done [#allocation3], 256
    $region17: #{utterance_net_out.1} parent=1 // pred_fallthru
      _
    %v28 = vld [vmem:[%s1] sm:$0xff]
    %v29 = vld [vmem:[#allocation2] sm:$0xff]
    %v30 = vld [vmem:[#allocation2 + $0x8] sm:$0xff]
    %v31 = vld [vmem:[%s2] sm:$0xff]
    %33 = vset.pattern.permute.xlu0 0
    %34 = vperm.xlu0 %33, %v31
    %v35 = vpop.permute.xlu0 %34
    %vm37 = vcmask 261120
    %v39 = vsel %vm37, %v28, 0
    %v42 = vsel %vm37, %v29, 0
    %v45 = vsel %vm37, %v30, 0
    %47 = vmatprep.subr.mxu0 0.0
    %48 = vmatpush1.xpose.msra.mxu0 %v42
    %49 = vmatprep.subr.mxu0 0.0
    %50 = vmatpush1.xpose.msra.mxu0 %v45
    %51 = vmatprep.subr.mxu0 0.0
    %52 = vmatpush1.xpose.msra.mxu0 0.0
    %53 = vmatprep.subr.mxu0 0.0
    %54 = vmatpush1.xpose.msra.mxu0 0.0
    %55 = vmatprep.subr.mxu0 0.0
    %56 = vmatpush1.xpose.msra.mxu0 0.0
    %57 = vmatprep.subr.mxu0 0.0
    %58 = vmatpush1.xpose.msra.mxu0 0.0
    %59 = vmatprep.subr.mxu0 0.0
    %60 = vmatpush1.xpose.msra.mxu0 0.0
    %61 = vmatprep.subr.mxu0 0.0
    %62 = vmatpush1.xpose.msra.mxu0 0.0
    %63 = vmatprep.subr.mxu0 0.0
    %64 = vmatpush1.xpose.msra.mxu0 0.0
    %65 = vmatprep.subr.mxu0 0.0
    %66 = vmatpush1.xpose.msra.mxu0 0.0
    %67 = vmatprep.subr.mxu0 0.0
    %68 = vmatpush1.xpose.msra.mxu0 0.0
    %69 = vmatprep.subr.mxu0 0.0
    %70 = vmatpush1.xpose.msra.mxu0 0.0
    %71 = vmatprep.subr.mxu0 0.0
    %72 = vmatpush1.xpose.msra.mxu0 0.0
    %73 = vmatprep.subr.mxu0 0.0
    %74 = vmatpush1.xpose.msra.mxu0 0.0
    %75 = vmatprep.subr.mxu0 0.0
    %76 = vmatpush1.xpose.msra.mxu0 0.0
    %77 = vmatprep.subr.mxu0 0.0
    %78 = vmatpush1.xpose.msra.mxu0 0.0
    %79 = vmatprep.subr.mxu0 0.0
    %80 = vmatpush1.xpose.msra.mxu0 0.0
    %81 = vmatprep.subr.mxu0 0.0
    %82 = vmatpush1.xpose.msra.mxu0 0.0
    %83 = vmatprep.subr.mxu0 0.0
    %84 = vmatpush1.xpose.msra.mxu0 0.0
    %85 = vmatprep.subr.mxu0 0.0
    %86 = vmatpush1.xpose.msra.mxu0 0.0
    %87 = vmatprep.subr.mxu0 0.0
    %88 = vmatpush1.xpose.msra.mxu0 0.0
    %89 = vmatprep.subr.mxu0 0.0
    %90 = vmatpush1.xpose.msra.mxu0 0.0
    %91 = vmatprep.subr.mxu0 0.0
    %92 = vmatpush1.xpose.msra.mxu0 0.0
    %93 = vmatprep.subr.mxu0 0.0
    %94 = vmatpush1.xpose.msra.mxu0 0.0
    %95 = vmatprep.subr.mxu0 0.0
    %96 = vmatpush1.xpose.msra.mxu0 0.0
    %97 = vmatprep.subr.mxu0 0.0
    %98 = vmatpush1.xpose.msra.mxu0 0.0
    %99 = vmatprep.subr.mxu0 0.0
    %100 = vmatpush1.xpose.msra.mxu0 0.0
    %101 = vmatprep.subr.mxu0 0.0
    %102 = vmatpush1.xpose.msra.mxu0 0.0
    %103 = vmatprep.subr.mxu0 0.0
    %104 = vmatpush1.xpose.msra.mxu0 0.0
    %105 = vmatprep.subr.mxu0 0.0
    %106 = vmatpush1.xpose.msra.mxu0 0.0
    %107 = vmatprep.subr.mxu0 0.0
    %108 = vmatpush1.xpose.msra.mxu0 0.0
    %109 = vmatprep.subr.mxu0 0.0
    %110 = vmatpush1.xpose.msra.mxu0 0.0
    %111 = vmatprep.mubr.f32.mxu0 0.0
    %112 = vmatmul.mubr.f32.gmra.mrb[0].mxu0 %v39
    %v113 = vpop.f32.mrb[0].mxu0
    %v114 = vadd.f32 %v35, %v113
    %v115 = vpop.f32.mrb[0].mxu0
    %116 = vdwg.mxu0
    %vm117 = vcmask 130048
    %118 = vst.msk [vmem:[%s3] sm:$0xff] %vm117, %v114
    // Predicated region
    $region18: #{utterance_net_out.1} parent=1 // pred_check
      _
    $region19: #{utterance_net_out.1} parent=1 // pred_check_branch
      %120 = sbr.rel (0) target = $region21
    $region20: #{utterance_net_out.1} parent=1 // pred_region
      _
    $region21: #{utterance_net_out.1} parent=1 // pred_fallthru
      _
    // Predicated region
    $region22: #{utterance_net_out.1} parent=1 // pred_check
      _
    $region23: #{utterance_net_out.1} parent=1 // pred_check_branch
      %122 = sbr.rel (0) target = $region25
    $region24: #{utterance_net_out.1} parent=1 // pred_region
      _
    $region25: #{utterance_net_out.1} parent=1 // pred_fallthru
      _
    %123 = vsyncpa [#allocation3], 1

</llo_original>
